<compile_context>
chip_gen: v7x
topology: tpu7x:2x2x1
jax: 0.10.0
libtpu: 0.0.40
codegen_flags: <defaults>
</compile_context>

<pallas_src>
import math

import jax
import jax.numpy as jnp
from jax.experimental import pallas as pl
from jax.experimental.pallas import tpu as pltpu

KSIZE = 6
PAD_L, PAD_R = 2, 3          # PyTorch Conv1d(padding='same'), k=6 -> pad (left=2, right=3)
BN_EPS = 1e-5


# --------------------------- fused Pallas kernel ------------------------------

def _encoder_block_kernel(x_ref, w1_ref, s1_ref, t1_ref, w2h_ref, w2x_ref,
                          s2_ref, t2_ref, skip_ref, pool_ref, xpad_ref, hpad_ref):
    """One batch tile of ConvBlock (conv1+BN+ReLU -> conv2+BN+ReLU) + MaxPool1d(2).

    x_ref:     (bn, L, C_in)           input tile (channels last), f32
    w1_ref:    (K*C_in, C1)            conv1 im2col weight, bf16
    s1/t1_ref: (1, C1)                 folded BN1 scale / shift (incl. conv1 bias), f32
    w2h_ref:   (K*C1, C1)              conv2 weight rows for the h channels, bf16
    w2x_ref:   (K*C_in, C1)            conv2 weight rows for the x channels, bf16
    s2/t2_ref: (1, C1)
    skip_ref:  (bn, L, C1)             ConvBlock output tile, f32
    pool_ref:  (bn, L//2, C1)          MaxPool1d(2) output tile, f32
    xpad_ref:  VMEM (bn, L+K-1, C_in)  'same'-padded x scratch, bf16
    hpad_ref:  VMEM (bn, L+K-1, C1)    'same'-padded h scratch, bf16
    """
    bn, L, C_in = x_ref.shape
    C1 = skip_ref.shape[-1]
    Lh = pool_ref.shape[1]
    K = KSIZE

    # ---- conv1: 'same' pad in bf16 scratch, im2col -> single MXU matmul ------
    # Zero only the pad-border rows (interior is fully overwritten just below).
    xpad_ref[:, 0:PAD_L, :] = jnp.zeros((bn, PAD_L, C_in), jnp.bfloat16)
    xpad_ref[:, PAD_L + L:PAD_L + L + PAD_R, :] = jnp.zeros((bn, PAD_R, C_in), jnp.bfloat16)
    xpad_ref[:, PAD_L:PAD_L + L, :] = x_ref[...].astype(jnp.bfloat16)   # single cast of x

    col1 = jnp.concatenate([xpad_ref[:, k:k + L, :] for k in range(K)], axis=-1)
    col1 = col1.reshape(bn * L, K * C_in)                                # bf16, batch folded into M
    h = jnp.dot(col1, w1_ref[...], preferred_element_type=jnp.float32)   # (bn*L, C1) f32
    h = jnp.maximum(h * s1_ref[...] + t1_ref[...], 0.0)                  # BN1 + ReLU epilogue
    # Dropout1d(p=0.1): identity in eval mode.

    # ---- conv2 on torch.cat([h, x], dim=C): split into two matmuls -----------
    # s = col(h) @ W2_h + col(x) @ W2_x, with col(x) == col1 (already built).
    hpad_ref[:, 0:PAD_L, :] = jnp.zeros((bn, PAD_L, C1), jnp.bfloat16)
    hpad_ref[:, PAD_L + L:PAD_L + L + PAD_R, :] = jnp.zeros((bn, PAD_R, C1), jnp.bfloat16)
    hpad_ref[:, PAD_L:PAD_L + L, :] = h.astype(jnp.bfloat16).reshape(bn, L, C1)  # single cast of h

    colh = jnp.concatenate([hpad_ref[:, k:k + L, :] for k in range(K)], axis=-1)
    colh = colh.reshape(bn * L, K * C1)
    s = jnp.dot(colh, w2h_ref[...], preferred_element_type=jnp.float32)
    s = s + jnp.dot(col1, w2x_ref[...], preferred_element_type=jnp.float32)
    s = jnp.maximum(s * s2_ref[...] + t2_ref[...], 0.0)                  # BN2 + ReLU epilogue
    skip_ref[...] = s.reshape(bn, L, C1)

    # ---- MaxPool1d(kernel=2, stride=2) via documented strided sublane reads --
    even = skip_ref[:, pl.ds(0, Lh, stride=2), :]
    odd = skip_ref[:, pl.ds(1, Lh, stride=2), :]
    pool_ref[...] = jnp.maximum(even, odd)


# --------------------------- parameter prep (outside the hot path) -------------

def _fold_bn(bias, bn_params):
    gamma, beta, mean, var = bn_params
    scale = gamma / jnp.sqrt(var + BN_EPS)
    shift = (bias - mean) * scale + beta
    return scale, shift


def prepare_encoder_block_params(p):
    """One-time conversion of PyTorch-layout params to kernel layout (run outside jit)."""
    C1, C_in, K = p['w1'].shape
    assert K == KSIZE
    # PyTorch (C_out, C_in, K) -> im2col (K*C_in, C_out); bf16 MXU operands.
    w1 = jnp.transpose(p['w1'], (2, 1, 0)).reshape(K * C_in, C1).astype(jnp.bfloat16)
    # conv2 input channels are ordered [h (C1), x (C_in)] (torch.cat([h, inputs], dim=1)).
    w2h = jnp.transpose(p['w2'][:, :C1, :], (2, 1, 0)).reshape(K * C1, C1).astype(jnp.bfloat16)
    w2x = jnp.transpose(p['w2'][:, C1:, :], (2, 1, 0)).reshape(K * C_in, C1).astype(jnp.bfloat16)
    s1, t1 = _fold_bn(p['b1'], p['bn1'])
    s2, t2 = _fold_bn(p['b2'], p['bn2'])
    return dict(w1=w1, w2h=w2h, w2x=w2x,
                s1=s1.reshape(1, C1).astype(jnp.float32),
                t1=t1.reshape(1, C1).astype(jnp.float32),
                s2=s2.reshape(1, C1).astype(jnp.float32),
                t2=t2.reshape(1, C1).astype(jnp.float32))


# --------------------------- forward wrapper ------------------------------------

def encoder_block_forward(x_ncl, kp, *, bn=1):
    """encoder_block.forward (eval mode).  x_ncl: (N, C_in, L) as in PyTorch.

    Returns (s, pooled) in NCL.  `bn` is the batch-tile size per grid step.
    """
    x = jnp.transpose(x_ncl, (0, 2, 1)).astype(jnp.float32)      # NCL -> NLC
    N, L, C_in = x.shape
    C1 = kp['w1'].shape[-1]
    Lh = L // 2
    K = KSIZE
    assert N % bn == 0, "batch tile must divide N"

    def vmem_full(shape):
        return pl.BlockSpec(shape, lambda i, _nd=len(shape): (0,) * _nd)

    skip, pool = pl.pallas_call(
        _encoder_block_kernel,
        out_shape=(jax.ShapeDtypeStruct((N, L, C1), jnp.float32),
                   jax.ShapeDtypeStruct((N, Lh, C1), jnp.float32)),
        grid=(N // bn,),
        in_specs=[
            pl.BlockSpec((bn, L, C_in), lambda i: (i, 0, 0)),    # x: batch-tiled, pipelined
            vmem_full(kp['w1'].shape),                           # weights / scales: grid-invariant
            vmem_full(kp['s1'].shape),
            vmem_full(kp['t1'].shape),
            vmem_full(kp['w2h'].shape),
            vmem_full(kp['w2x'].shape),
            vmem_full(kp['s2'].shape),
            vmem_full(kp['t2'].shape),
        ],
        out_specs=(pl.BlockSpec((bn, L, C1), lambda i: (i, 0, 0)),
                   pl.BlockSpec((bn, Lh, C1), lambda i: (i, 0, 0))),
        scratch_shapes=[pltpu.VMEM((bn, L + K - 1, C_in), jnp.bfloat16),
                        pltpu.VMEM((bn, L + K - 1, C1), jnp.bfloat16)],
        compiler_params=pltpu.CompilerParams(
            dimension_semantics=("parallel",)),                  # dual-TC sharding on v7x
    )(x, kp['w1'], kp['s1'], kp['t1'], kp['w2h'], kp['w2x'], kp['s2'], kp['t2'])

    return jnp.transpose(skip, (0, 2, 1)), jnp.transpose(pool, (0, 2, 1))


# --------------------------- pure-JAX reference ----------------------------------

def _reference_forward(x_ncl, p):
    x = jnp.transpose(x_ncl, (0, 2, 1))                          # NLC

    def conv_same(v, w, b):                                      # w: (C_out, C_in, K)
        out = jax.lax.conv_general_dilated(
            v, jnp.transpose(w, (2, 1, 0)),                      # (K, C_in, C_out)
            window_strides=(1,), padding=[(PAD_L, PAD_R)],
            dimension_numbers=("NWC", "WIO", "NWC"))
        return out + b

    def bn_eval(v, bn_params):
        gamma, beta, mean, var = bn_params
        return (v - mean) / jnp.sqrt(var + BN_EPS) * gamma + beta

    h = jnp.maximum(bn_eval(conv_same(x, p['w1'], p['b1']), p['bn1']), 0.0)
    cat = jnp.concatenate([h, x], axis=-1)
    s = jnp.maximum(bn_eval(conv_same(cat, p['w2'], p['b2']), p['bn2']), 0.0)
    N, L, C1 = s.shape
    pool = jnp.max(s.reshape(N, L // 2, 2, C1), axis=2)
    return jnp.transpose(s, (0, 2, 1)), jnp.transpose(pool, (0, 2, 1))


# --------------------------- deterministic init ----------------------------------

def _init_conv(key, c_in, c_out, k):
    k1, k2 = jax.random.split(key)
    bound = 1.0 / math.sqrt(c_in * k)
    w = jax.random.uniform(k1, (c_out, c_in, k), jnp.float32, -bound, bound)
    b = jax.random.uniform(k2, (c_out,), jnp.float32, -bound, bound)
    return w, b


def _init_bn(key, c):
    k1, k2, k3, k4 = jax.random.split(key, 4)
    gamma = 1.0 + 0.1 * jax.random.normal(k1, (c,), jnp.float32)
    beta = 0.1 * jax.random.normal(k2, (c,), jnp.float32)
    mean = 0.1 * jax.random.normal(k3, (c,), jnp.float32)
    var = 1.0 + 0.1 * jax.random.uniform(k4, (c,), jnp.float32)
    return gamma, beta, mean, var


def init_encoder_block(key, in_c, out_c):
    k1, k2, k3, k4 = jax.random.split(key, 4)
    w1, b1 = _init_conv(k1, in_c, out_c, KSIZE)
    w2, b2 = _init_conv(k3, in_c + out_c, out_c, KSIZE)
    return dict(w1=w1, b1=b1, bn1=_init_bn(k2, out_c),
                w2=w2, b2=b2, bn2=_init_bn(k4, out_c))


# --------------------------- main --------------------------------------------------

if __name__ == "__main__":
    key = jax.random.PRNGKey(0)
    pkey, xkey = jax.random.split(key)

    batch, in_c, out_c, length = 2, 4, 16, 16
    params = init_encoder_block(pkey, in_c, out_c)
    kparams = prepare_encoder_block_params(params)               # one-time, outside jit
    x = jax.random.normal(xkey, (batch, in_c, length), jnp.float32)   # PyTorch NCL

    fwd = jax.jit(encoder_block_forward)
    s, pooled = fwd(x, kparams)
    s = jax.block_until_ready(s)
    pooled = jax.block_until_ready(pooled)

    assert s.shape == (batch, out_c, length), s.shape
    assert pooled.shape == (batch, out_c, length // 2), pooled.shape
    assert jnp.all(jnp.isfinite(s)) and jnp.all(jnp.isfinite(pooled))

    # Pure-JAX f32 reference; bf16 MXU operands -> ~1e-2 relative tolerance.
    s_ref, p_ref = _reference_forward(x, params)
    assert jnp.allclose(s, s_ref, atol=3e-2, rtol=3e-2), float(jnp.max(jnp.abs(s - s_ref)))
    assert jnp.allclose(pooled, p_ref, atol=3e-2, rtol=3e-2), float(jnp.max(jnp.abs(pooled - p_ref)))

    print("KERNEL_OK")
</pallas_src>

<mosaic_0001>
module attributes {stable_mosaic.version = 11 : i64} {
  func.func @_encoder_block_kernel(%arg0: i32, %arg1: memref<1x16x4xf32, #tpu.memory_space<vmem>>, %arg2: memref<24x16xbf16, #tpu.memory_space<vmem>>, %arg3: memref<1x16xf32, #tpu.memory_space<vmem>>, %arg4: memref<1x16xf32, #tpu.memory_space<vmem>>, %arg5: memref<96x16xbf16, #tpu.memory_space<vmem>>, %arg6: memref<24x16xbf16, #tpu.memory_space<vmem>>, %arg7: memref<1x16xf32, #tpu.memory_space<vmem>>, %arg8: memref<1x16xf32, #tpu.memory_space<vmem>>, %arg9: memref<1x16x16xf32, #tpu.memory_space<vmem>>, %arg10: memref<1x8x16xf32, #tpu.memory_space<vmem>>, %arg11: memref<1x21x4xbf16, #tpu.memory_space<vmem>>, %arg12: memref<1x21x16xbf16, #tpu.memory_space<vmem>>) attributes {dimension_semantics = [#tpu.dimension_semantics<parallel>], iteration_bounds = array<i64: 2>, scalar_prefetch = 0 : i64, scratch_operands = 2 : i64, tpu.core_type = #tpu.core_type<tc>, window_params = [{transform_indices = @transform_0, window_bounds = array<i64: 1, 16, 4>}, {pipeline_mode = #tpu.pipeline_mode<synchronous>, transform_indices = @transform_1, window_bounds = array<i64: 24, 16>}, {pipeline_mode = #tpu.pipeline_mode<synchronous>, transform_indices = @transform_2, window_bounds = array<i64: 1, 16>}, {pipeline_mode = #tpu.pipeline_mode<synchronous>, transform_indices = @transform_3, window_bounds = array<i64: 1, 16>}, {pipeline_mode = #tpu.pipeline_mode<synchronous>, transform_indices = @transform_4, window_bounds = array<i64: 96, 16>}, {pipeline_mode = #tpu.pipeline_mode<synchronous>, transform_indices = @transform_5, window_bounds = array<i64: 24, 16>}, {pipeline_mode = #tpu.pipeline_mode<synchronous>, transform_indices = @transform_6, window_bounds = array<i64: 1, 16>}, {pipeline_mode = #tpu.pipeline_mode<synchronous>, transform_indices = @transform_7, window_bounds = array<i64: 1, 16>}, {transform_indices = @transform_8, window_bounds = array<i64: 1, 16, 16>}, {transform_indices = @transform_9, window_bounds = array<i64: 1, 8, 16>}]} {
    %cst = arith.constant 0.000000e+00 : bf16
    %0 = vector.broadcast %cst : bf16 to vector<1x2x4xbf16>
    %c0 = arith.constant 0 : index
    %c0_0 = arith.constant 0 : index
    %c0_1 = arith.constant 0 : index
    %1 = vector.load %arg11[%c0, %c0_0, %c0_1] : memref<1x21x4xbf16, #tpu.memory_space<vmem>>, vector<1x2x4xbf16>
    tpu.vector_store %arg11[%c0, %c0_0, %c0_1], %0 {strides = array<i32>} : memref<1x21x4xbf16, #tpu.memory_space<vmem>>, vector<1x2x4xbf16>,
    %cst_2 = arith.constant 0.000000e+00 : bf16
    %2 = vector.broadcast %cst_2 : bf16 to vector<1x3x4xbf16>
    %c0_3 = arith.constant 0 : index
    %c18 = arith.constant 18 : index
    %c0_4 = arith.constant 0 : index
    %3 = vector.load %arg11[%c0_3, %c18, %c0_4] : memref<1x21x4xbf16, #tpu.memory_space<vmem>>, vector<1x3x4xbf16>
    tpu.vector_store %arg11[%c0_3, %c18, %c0_4], %2 {strides = array<i32>} : memref<1x21x4xbf16, #tpu.memory_space<vmem>>, vector<1x3x4xbf16>,
    %c0_5 = arith.constant 0 : index
    %c0_6 = arith.constant 0 : index
    %c0_7 = arith.constant 0 : index
    %4 = vector.load %arg1[%c0_5, %c0_6, %c0_7] : memref<1x16x4xf32, #tpu.memory_space<vmem>>, vector<1x16x4xf32>
    %5 = arith.truncf %4 : vector<1x16x4xf32> to vector<1x16x4xbf16>
    %c0_8 = arith.constant 0 : index
    %c2 = arith.constant 2 : index
    %c0_9 = arith.constant 0 : index
    %6 = vector.load %arg11[%c0_8, %c2, %c0_9] : memref<1x21x4xbf16, #tpu.memory_space<vmem>>, vector<1x16x4xbf16>
    tpu.vector_store %arg11[%c0_8, %c2, %c0_9], %5 {strides = array<i32>} : memref<1x21x4xbf16, #tpu.memory_space<vmem>>, vector<1x16x4xbf16>,
    %c0_10 = arith.constant 0 : index
    %c0_11 = arith.constant 0 : index
    %c0_12 = arith.constant 0 : index
    %7 = vector.load %arg11[%c0_10, %c0_11, %c0_12] : memref<1x21x4xbf16, #tpu.memory_space<vmem>>, vector<1x16x4xbf16>
    %c0_13 = arith.constant 0 : index
    %c1 = arith.constant 1 : index
    %c0_14 = arith.constant 0 : index
    %8 = vector.load %arg11[%c0_13, %c1, %c0_14] : memref<1x21x4xbf16, #tpu.memory_space<vmem>>, vector<1x16x4xbf16>
    %c0_15 = arith.constant 0 : index
    %c2_16 = arith.constant 2 : index
    %c0_17 = arith.constant 0 : index
    %9 = vector.load %arg11[%c0_15, %c2_16, %c0_17] : memref<1x21x4xbf16, #tpu.memory_space<vmem>>, vector<1x16x4xbf16>
    %c0_18 = arith.constant 0 : index
    %c3 = arith.constant 3 : index
    %c0_19 = arith.constant 0 : index
    %10 = vector.load %arg11[%c0_18, %c3, %c0_19] : memref<1x21x4xbf16, #tpu.memory_space<vmem>>, vector<1x16x4xbf16>
    %c0_20 = arith.constant 0 : index
    %c4 = arith.constant 4 : index
    %c0_21 = arith.constant 0 : index
    %11 = vector.load %arg11[%c0_20, %c4, %c0_21] : memref<1x21x4xbf16, #tpu.memory_space<vmem>>, vector<1x16x4xbf16>
    %c0_22 = arith.constant 0 : index
    %c5 = arith.constant 5 : index
    %c0_23 = arith.constant 0 : index
    %12 = vector.load %arg11[%c0_22, %c5, %c0_23] : memref<1x21x4xbf16, #tpu.memory_space<vmem>>, vector<1x16x4xbf16>
    %13 = tpu.concatenate %7, %8, %9, %10, %11, %12 in 2 : vector<1x16x4xbf16>, vector<1x16x4xbf16>, vector<1x16x4xbf16>, vector<1x16x4xbf16>, vector<1x16x4xbf16>, vector<1x16x4xbf16> -> vector<1x16x24xbf16>
    %14 = vector.shape_cast %13 : vector<1x16x24xbf16> to vector<16x24xbf16>
    %c0_24 = arith.constant 0 : index
    %c0_25 = arith.constant 0 : index
    %15 = vector.load %arg2[%c0_24, %c0_25] : memref<24x16xbf16, #tpu.memory_space<vmem>>, vector<24x16xbf16>
    %cst_26 = arith.constant dense<0.000000e+00> : vector<16x16xf32>
    %16 = tpu.matmul %14, %15, %cst_26 {dimension_numbers = #tpu.dot_dimension_numbers<[1], [0], [0], [1], [0, 0, 1, 1], [], []>} : vector<16x24xbf16>, vector<24x16xbf16>, vector<16x16xf32> -> vector<16x16xf32>
    %c0_27 = arith.constant 0 : index
    %c0_28 = arith.constant 0 : index
    %17 = vector.load %arg3[%c0_27, %c0_28] : memref<1x16xf32, #tpu.memory_space<vmem>>, vector<1x16xf32>
    %18 = vector.broadcast %17 : vector<1x16xf32> to vector<16x16xf32>
    %19 = arith.mulf %16, %18 : vector<16x16xf32>
    %c0_29 = arith.constant 0 : index
    %c0_30 = arith.constant 0 : index
    %20 = vector.load %arg4[%c0_29, %c0_30] : memref<1x16xf32, #tpu.memory_space<vmem>>, vector<1x16xf32>
    %21 = vector.broadcast %20 : vector<1x16xf32> to vector<16x16xf32>
    %22 = arith.addf %19, %21 : vector<16x16xf32>
    %cst_31 = arith.constant 0.000000e+00 : f32
    %23 = vector.broadcast %cst_31 : f32 to vector<16x16xf32>
    %24 = arith.maximumf %22, %23 : vector<16x16xf32>
    %cst_32 = arith.constant 0.000000e+00 : bf16
    %25 = vector.broadcast %cst_32 : bf16 to vector<1x2x16xbf16>
    %c0_33 = arith.constant 0 : index
    %c0_34 = arith.constant 0 : index
    %c0_35 = arith.constant 0 : index
    %26 = vector.load %arg12[%c0_33, %c0_34, %c0_35] : memref<1x21x16xbf16, #tpu.memory_space<vmem>>, vector<1x2x16xbf16>
    tpu.vector_store %arg12[%c0_33, %c0_34, %c0_35], %25 {strides = array<i32>} : memref<1x21x16xbf16, #tpu.memory_space<vmem>>, vector<1x2x16xbf16>,
    %cst_36 = arith.constant 0.000000e+00 : bf16
    %27 = vector.broadcast %cst_36 : bf16 to vector<1x3x16xbf16>
    %c0_37 = arith.constant 0 : index
    %c18_38 = arith.constant 18 : index
    %c0_39 = arith.constant 0 : index
    %28 = vector.load %arg12[%c0_37, %c18_38, %c0_39] : memref<1x21x16xbf16, #tpu.memory_space<vmem>>, vector<1x3x16xbf16>
    tpu.vector_store %arg12[%c0_37, %c18_38, %c0_39], %27 {strides = array<i32>} : memref<1x21x16xbf16, #tpu.memory_space<vmem>>, vector<1x3x16xbf16>,
    %29 = arith.truncf %24 : vector<16x16xf32> to vector<16x16xbf16>
    %30 = vector.shape_cast %29 : vector<16x16xbf16> to vector<1x16x16xbf16>
    %c0_40 = arith.constant 0 : index
    %c2_41 = arith.constant 2 : index
    %c0_42 = arith.constant 0 : index
    %31 = vector.load %arg12[%c0_40, %c2_41, %c0_42] : memref<1x21x16xbf16, #tpu.memory_space<vmem>>, vector<1x16x16xbf16>
    tpu.vector_store %arg12[%c0_40, %c2_41, %c0_42], %30 {strides = array<i32>} : memref<1x21x16xbf16, #tpu.memory_space<vmem>>, vector<1x16x16xbf16>,
    %c0_43 = arith.constant 0 : index
    %c0_44 = arith.constant 0 : index
    %c0_45 = arith.constant 0 : index
    %32 = vector.load %arg12[%c0_43, %c0_44, %c0_45] : memref<1x21x16xbf16, #tpu.memory_space<vmem>>, vector<1x16x16xbf16>
    %c0_46 = arith.constant 0 : index
    %c1_47 = arith.constant 1 : index
    %c0_48 = arith.constant 0 : index
    %33 = vector.load %arg12[%c0_46, %c1_47, %c0_48] : memref<1x21x16xbf16, #tpu.memory_space<vmem>>, vector<1x16x16xbf16>
    %c0_49 = arith.constant 0 : index
    %c2_50 = arith.constant 2 : index
    %c0_51 = arith.constant 0 : index
    %34 = vector.load %arg12[%c0_49, %c2_50, %c0_51] : memref<1x21x16xbf16, #tpu.memory_space<vmem>>, vector<1x16x16xbf16>
    %c0_52 = arith.constant 0 : index
    %c3_53 = arith.constant 3 : index
    %c0_54 = arith.constant 0 : index
    %35 = vector.load %arg12[%c0_52, %c3_53, %c0_54] : memref<1x21x16xbf16, #tpu.memory_space<vmem>>, vector<1x16x16xbf16>
    %c0_55 = arith.constant 0 : index
    %c4_56 = arith.constant 4 : index
    %c0_57 = arith.constant 0 : index
    %36 = vector.load %arg12[%c0_55, %c4_56, %c0_57] : memref<1x21x16xbf16, #tpu.memory_space<vmem>>, vector<1x16x16xbf16>
    %c0_58 = arith.constant 0 : index
    %c5_59 = arith.constant 5 : index
    %c0_60 = arith.constant 0 : index
    %37 = vector.load %arg12[%c0_58, %c5_59, %c0_60] : memref<1x21x16xbf16, #tpu.memory_space<vmem>>, vector<1x16x16xbf16>
    %38 = tpu.concatenate %32, %33, %34, %35, %36, %37 in 2 : vector<1x16x16xbf16>, vector<1x16x16xbf16>, vector<1x16x16xbf16>, vector<1x16x16xbf16>, vector<1x16x16xbf16>, vector<1x16x16xbf16> -> vector<1x16x96xbf16>
    %39 = vector.shape_cast %38 : vector<1x16x96xbf16> to vector<16x96xbf16>
    %c0_61 = arith.constant 0 : index
    %c0_62 = arith.constant 0 : index
    %40 = vector.load %arg5[%c0_61, %c0_62] : memref<96x16xbf16, #tpu.memory_space<vmem>>, vector<96x16xbf16>
    %cst_63 = arith.constant dense<0.000000e+00> : vector<16x16xf32>
    %41 = tpu.matmul %39, %40, %cst_63 {dimension_numbers = #tpu.dot_dimension_numbers<[1], [0], [0], [1], [0, 0, 1, 1], [], []>} : vector<16x96xbf16>, vector<96x16xbf16>, vector<16x16xf32> -> vector<16x16xf32>
    %c0_64 = arith.constant 0 : index
    %c0_65 = arith.constant 0 : index
    %42 = vector.load %arg6[%c0_64, %c0_65] : memref<24x16xbf16, #tpu.memory_space<vmem>>, vector<24x16xbf16>
    %cst_66 = arith.constant dense<0.000000e+00> : vector<16x16xf32>
    %43 = tpu.matmul %14, %42, %cst_66 {dimension_numbers = #tpu.dot_dimension_numbers<[1], [0], [0], [1], [0, 0, 1, 1], [], []>} : vector<16x24xbf16>, vector<24x16xbf16>, vector<16x16xf32> -> vector<16x16xf32>
    %44 = arith.addf %41, %43 : vector<16x16xf32>
    %c0_67 = arith.constant 0 : index
    %c0_68 = arith.constant 0 : index
    %45 = vector.load %arg7[%c0_67, %c0_68] : memref<1x16xf32, #tpu.memory_space<vmem>>, vector<1x16xf32>
    %46 = vector.broadcast %45 : vector<1x16xf32> to vector<16x16xf32>
    %47 = arith.mulf %44, %46 : vector<16x16xf32>
    %c0_69 = arith.constant 0 : index
    %c0_70 = arith.constant 0 : index
    %48 = vector.load %arg8[%c0_69, %c0_70] : memref<1x16xf32, #tpu.memory_space<vmem>>, vector<1x16xf32>
    %49 = vector.broadcast %48 : vector<1x16xf32> to vector<16x16xf32>
    %50 = arith.addf %47, %49 : vector<16x16xf32>
    %cst_71 = arith.constant 0.000000e+00 : f32
    %51 = vector.broadcast %cst_71 : f32 to vector<16x16xf32>
    %52 = arith.maximumf %50, %51 : vector<16x16xf32>
    %53 = vector.shape_cast %52 : vector<16x16xf32> to vector<1x16x16xf32>
    %c0_72 = arith.constant 0 : index
    %c0_73 = arith.constant 0 : index
    %c0_74 = arith.constant 0 : index
    %54 = vector.load %arg9[%c0_72, %c0_73, %c0_74] : memref<1x16x16xf32, #tpu.memory_space<vmem>>, vector<1x16x16xf32>
    tpu.vector_store %arg9[%c0_72, %c0_73, %c0_74], %53 {strides = array<i32>} : memref<1x16x16xf32, #tpu.memory_space<vmem>>, vector<1x16x16xf32>,
    %c0_75 = arith.constant 0 : index
    %c0_76 = arith.constant 0 : index
    %c0_77 = arith.constant 0 : index
    %55 = tpu.strided_load %arg9[%c0_75, %c0_76, %c0_77] {strides = array<i32: 1, 2, 1>} : memref<1x16x16xf32, #tpu.memory_space<vmem>>, vector<1x8x16xf32>
    %c0_78 = arith.constant 0 : index
    %c1_79 = arith.constant 1 : index
    %c0_80 = arith.constant 0 : index
    %56 = tpu.strided_load %arg9[%c0_78, %c1_79, %c0_80] {strides = array<i32: 1, 2, 1>} : memref<1x16x16xf32, #tpu.memory_space<vmem>>, vector<1x8x16xf32>
    %57 = arith.maximumf %55, %56 : vector<1x8x16xf32>
    %c0_81 = arith.constant 0 : index
    %c0_82 = arith.constant 0 : index
    %c0_83 = arith.constant 0 : index
    %58 = vector.load %arg10[%c0_81, %c0_82, %c0_83] : memref<1x8x16xf32, #tpu.memory_space<vmem>>, vector<1x8x16xf32>
    tpu.vector_store %arg10[%c0_81, %c0_82, %c0_83], %57 {strides = array<i32>} : memref<1x8x16xf32, #tpu.memory_space<vmem>>, vector<1x8x16xf32>,
    return
  }
  func.func @transform_0(%arg0: i32) -> (i32, i32, i32) {
    %c0_i32 = arith.constant 0 : i32
    %c0_i32_0 = arith.constant 0 : i32
    %c0_i32_1 = arith.constant 0 : i32
    return %arg0, %c0_i32, %c0_i32_0 : i32, i32, i32
  }
  func.func @transform_1(%arg0: i32) -> (i32, i32) {
    %c0_i32 = arith.constant 0 : i32
    %c0_i32_0 = arith.constant 0 : i32
    %c0_i32_1 = arith.constant 0 : i32
    return %c0_i32, %c0_i32_0 : i32, i32
  }
  func.func @transform_2(%arg0: i32) -> (i32, i32) {
    %c0_i32 = arith.constant 0 : i32
    %c0_i32_0 = arith.constant 0 : i32
    %c0_i32_1 = arith.constant 0 : i32
    return %c0_i32, %c0_i32_0 : i32, i32
  }
  func.func @transform_3(%arg0: i32) -> (i32, i32) {
    %c0_i32 = arith.constant 0 : i32
    %c0_i32_0 = arith.constant 0 : i32
    %c0_i32_1 = arith.constant 0 : i32
    return %c0_i32, %c0_i32_0 : i32, i32
  }
  func.func @transform_4(%arg0: i32) -> (i32, i32) {
    %c0_i32 = arith.constant 0 : i32
    %c0_i32_0 = arith.constant 0 : i32
    %c0_i32_1 = arith.constant 0 : i32
    return %c0_i32, %c0_i32_0 : i32, i32
  }
  func.func @transform_5(%arg0: i32) -> (i32, i32) {
    %c0_i32 = arith.constant 0 : i32
    %c0_i32_0 = arith.constant 0 : i32
    %c0_i32_1 = arith.constant 0 : i32
    return %c0_i32, %c0_i32_0 : i32, i32
  }
  func.func @transform_6(%arg0: i32) -> (i32, i32) {
    %c0_i32 = arith.constant 0 : i32
    %c0_i32_0 = arith.constant 0 : i32
    %c0_i32_1 = arith.constant 0 : i32
    return %c0_i32, %c0_i32_0 : i32, i32
  }
  func.func @transform_7(%arg0: i32) -> (i32, i32) {
    %c0_i32 = arith.constant 0 : i32
    %c0_i32_0 = arith.constant 0 : i32
    %c0_i32_1 = arith.constant 0 : i32
    return %c0_i32, %c0_i32_0 : i32, i32
  }
  func.func @transform_8(%arg0: i32) -> (i32, i32, i32) {
    %c0_i32 = arith.constant 0 : i32
    %c0_i32_0 = arith.constant 0 : i32
    %c0_i32_1 = arith.constant 0 : i32
    return %arg0, %c0_i32, %c0_i32_0 : i32, i32, i32
  }
  func.func @transform_9(%arg0: i32) -> (i32, i32, i32) {
    %c0_i32 = arith.constant 0 : i32
    %c0_i32_0 = arith.constant 0 : i32
    %c0_i32_1 = arith.constant 0 : i32
    return %arg0, %c0_i32, %c0_i32_0 : i32, i32, i32
  }
}

</mosaic_0001>

<llo_original>
// kernel: encoder_block_forward.1
$region0: #{encoder_block_forward.1}
  #allocation0 [shape = 'u32[]', space=smem, size = 0x4, offset = 0x4, fixed_abs, tag = 'smem constant byte address 0x4 - core index']
  #allocation1 [shape = 'u32[144,128]{1,0:T(1,128)}', space=vmem, size = 0x12000, scoped, tag = 'internal scratch']
  #allocation2 [shape = 'bf16[1,21,4]{2,1,0:T(8,128)(2,1)}', space=vmem, size = 0x1800, scoped, tag = 'scratch operand']
  #allocation3 [shape = 'bf16[1,21,16]{2,1,0:T(8,128)(2,1)}', space=vmem, size = 0x1800, scoped, tag = 'scratch operand']
  %s0 = inlined_call_operand.vmem [shape: f32[2,16,4], index: 0, kind: input, shape index: {}]
  %s1 = inlined_call_operand.vmem [shape: bf16[24,16], index: 1, kind: input, shape index: {}]
  %s2 = inlined_call_operand.vmem [shape: f32[1,16], index: 2, kind: input, shape index: {}]
  %s3 = inlined_call_operand.vmem [shape: f32[1,16], index: 3, kind: input, shape index: {}]
  %s4 = inlined_call_operand.vmem [shape: bf16[96,16], index: 4, kind: input, shape index: {}]
  %s5 = inlined_call_operand.vmem [shape: bf16[24,16], index: 5, kind: input, shape index: {}]
  %s6 = inlined_call_operand.vmem [shape: f32[1,16], index: 6, kind: input, shape index: {}]
  %s7 = inlined_call_operand.vmem [shape: f32[1,16], index: 7, kind: input, shape index: {}]
  %s8 = inlined_call_operand.vmem [shape: f32[2,16,16], index: 8, kind: output, shape index: {0}]
  %s9 = inlined_call_operand.hbm [shape: f32[2,8,16], index: 9, kind: output, shape index: {1}]
  %10 = xla_tuple %s8, %s9
  %s11 = sld [smem:[#allocation0]]
  $region73: #{encoder_block_forward.1} parent=0
    _
  %s13 = ssub.s32 1, %s11
  %s14 = scalar_select 0, %s13, %s11
  $region1: #{encoder_block_forward.1} parent=0
    #allocation4 [shape = 'u8[8192]{0}', space=vmem, size = 0x2000, scoped, tag = 'output window, operand 1']
    #allocation5 [shape = 's32[2]{0}', space=sflag, size = 0x8, scoped, tag = 'scoped memory for encoder_block_forward.1']
    %15 = vsyncpa [#allocation5], 0
    %s16 = scalar_lea.sflag [#allocation5], 1
    %17 = vsyncpa %s16, 0
    loop: start=0, step=1, limit=4
    $region2: #{encoder_block_forward.1} parent=1 // loop_pre_header
      _
    $region3: #{encoder_block_forward.1} parent=1 // loop_header
      %s19 = sphi 0, %s23
      %p20 = scmp.ge.s32.totalorder %s19, 4
      %s29 = sphi 0, %s31
      %s32 = sphi 0, %s29
      %s33 = sphi 0, %s32
      %s49 = sphi 0, %s33
      %s53 = sphi 0, %s53
      %s55 = sphi 0, %s53
      %s56 = sphi 0, %s55
      %s70 = sphi 0, %s56
      %s74 = sphi 0, %s74
      %s76 = sphi 0, %s74
      %s77 = sphi 0, %s76
      %s91 = sphi 0, %s77
      %s95 = sphi 0, %s95
      %s97 = sphi 0, %s95
      %s98 = sphi 0, %s97
      %s112 = sphi 0, %s98
      %s116 = sphi 0, %s116
      %s118 = sphi 0, %s116
      %s119 = sphi 0, %s118
      %s133 = sphi 0, %s119
      %s137 = sphi 0, %s137
      %s139 = sphi 0, %s137
      %s140 = sphi 0, %s139
      %s154 = sphi 0, %s140
      %s158 = sphi 0, %s158
      %s160 = sphi 0, %s158
      %s161 = sphi 0, %s160
      %s175 = sphi 0, %s161
      %s179 = sphi 0, %s179
      %s181 = sphi 0, %s179
      %s182 = sphi 0, %s181
      %s196 = sphi 0, %s182
      %s202 = sphi 0, %s204
      %s205 = sphi 0, %s202
      %s206 = sphi 0, %s205
      %s222 = sphi 0, %s206
      %s228 = sphi 0, %s230
      %s231 = sphi 0, %s228
      %s232 = sphi 0, %s231
      %s248 = sphi 0, %s232
    $region4: #{encoder_block_forward.1} parent=1 // loop_header_branch
      %22 = sbr.rel (%p20) target = $region8
    $region5: #{encoder_block_forward.1} parent=1 // loop_body
      %s24 = ssub.s32 %s19, 1
      %s25 = ssub.s32 %s19, 2
      %s26 = sadd.s32 %s19, 1
      %s27 = ssub.s32 %s19, %s26
      %p28 = scmp.eq.s32.totalorder %s27, 0
      %s30 = sadd.s32 %s29, 1
      %s31 = scalar_select %p28, %s29, %s30
      %p34 = pneg %p28
      %p35 = scmp.eq.s32.totalorder %s19, 1
      %p36 = por %p34, %p35
      %p37 = scmp.ne.s32.totalorder %s29, %s32
      %p38 = scmp.eq.s32.totalorder %s19, 0
      %p39 = por %p37, %p38
      %p40 = scmp.ne.s32.totalorder %s29, %s32
      %p41 = scmp.eq.s32.totalorder %s24, 1
      %p42 = por %p40, %p41
      %p43 = scmp.ne.s32.totalorder %s32, %s33
      %p44 = scmp.eq.s32.totalorder %s24, 0
      %p45 = por %p43, %p44
      %p46 = scmp.ne.s32.totalorder %s32, %s33
      %p47 = scmp.eq.s32.totalorder %s25, 1
      %p48 = por %p46, %p47
      %p50 = scmp.ne.s32.totalorder %s33, %s49
      %p51 = scmp.eq.s32.totalorder %s25, 0
      %p52 = por %p50, %p51
      %s54 = sadd.s32 %s53, 1
      %p57 = scmp.eq.s32.totalorder %s19, 1
      %p58 = scmp.ne.s32.totalorder %s53, %s55
      %p59 = scmp.eq.s32.totalorder %s19, 0
      %p60 = por %p58, %p59
      %p61 = scmp.ne.s32.totalorder %s53, %s55
      %p62 = scmp.eq.s32.totalorder %s24, 1
      %p63 = por %p61, %p62
      %p64 = scmp.ne.s32.totalorder %s55, %s56
      %p65 = scmp.eq.s32.totalorder %s24, 0
      %p66 = por %p64, %p65
      %p67 = scmp.ne.s32.totalorder %s55, %s56
      %p68 = scmp.eq.s32.totalorder %s25, 1
      %p69 = por %p67, %p68
      %p71 = scmp.ne.s32.totalorder %s56, %s70
      %p72 = scmp.eq.s32.totalorder %s25, 0
      %p73 = por %p71, %p72
      %s75 = sadd.s32 %s74, 1
      %p78 = scmp.eq.s32.totalorder %s19, 1
      %p79 = scmp.ne.s32.totalorder %s74, %s76
      %p80 = scmp.eq.s32.totalorder %s19, 0
      %p81 = por %p79, %p80
      %p82 = scmp.ne.s32.totalorder %s74, %s76
      %p83 = scmp.eq.s32.totalorder %s24, 1
      %p84 = por %p82, %p83
      %p85 = scmp.ne.s32.totalorder %s76, %s77
      %p86 = scmp.eq.s32.totalorder %s24, 0
      %p87 = por %p85, %p86
      %p88 = scmp.ne.s32.totalorder %s76, %s77
      %p89 = scmp.eq.s32.totalorder %s25, 1
      %p90 = por %p88, %p89
      %p92 = scmp.ne.s32.totalorder %s77, %s91
      %p93 = scmp.eq.s32.totalorder %s25, 0
      %p94 = por %p92, %p93
      %s96 = sadd.s32 %s95, 1
      %p99 = scmp.eq.s32.totalorder %s19, 1
      %p100 = scmp.ne.s32.totalorder %s95, %s97
      %p101 = scmp.eq.s32.totalorder %s19, 0
      %p102 = por %p100, %p101
      %p103 = scmp.ne.s32.totalorder %s95, %s97
      %p104 = scmp.eq.s32.totalorder %s24, 1
      %p105 = por %p103, %p104
      %p106 = scmp.ne.s32.totalorder %s97, %s98
      %p107 = scmp.eq.s32.totalorder %s24, 0
      %p108 = por %p106, %p107
      %p109 = scmp.ne.s32.totalorder %s97, %s98
      %p110 = scmp.eq.s32.totalorder %s25, 1
      %p111 = por %p109, %p110
      %p113 = scmp.ne.s32.totalorder %s98, %s112
      %p114 = scmp.eq.s32.totalorder %s25, 0
      %p115 = por %p113, %p114
      %s117 = sadd.s32 %s116, 1
      %p120 = scmp.eq.s32.totalorder %s19, 1
      %p121 = scmp.ne.s32.totalorder %s116, %s118
      %p122 = scmp.eq.s32.totalorder %s19, 0
      %p123 = por %p121, %p122
      %p124 = scmp.ne.s32.totalorder %s116, %s118
      %p125 = scmp.eq.s32.totalorder %s24, 1
      %p126 = por %p124, %p125
      %p127 = scmp.ne.s32.totalorder %s118, %s119
      %p128 = scmp.eq.s32.totalorder %s24, 0
      %p129 = por %p127, %p128
      %p130 = scmp.ne.s32.totalorder %s118, %s119
      %p131 = scmp.eq.s32.totalorder %s25, 1
      %p132 = por %p130, %p131
      %p134 = scmp.ne.s32.totalorder %s119, %s133
      %p135 = scmp.eq.s32.totalorder %s25, 0
      %p136 = por %p134, %p135
      %s138 = sadd.s32 %s137, 1
      %p141 = scmp.eq.s32.totalorder %s19, 1
      %p142 = scmp.ne.s32.totalorder %s137, %s139
      %p143 = scmp.eq.s32.totalorder %s19, 0
      %p144 = por %p142, %p143
      %p145 = scmp.ne.s32.totalorder %s137, %s139
      %p146 = scmp.eq.s32.totalorder %s24, 1
      %p147 = por %p145, %p146
      %p148 = scmp.ne.s32.totalorder %s139, %s140
      %p149 = scmp.eq.s32.totalorder %s24, 0
      %p150 = por %p148, %p149
      %p151 = scmp.ne.s32.totalorder %s139, %s140
      %p152 = scmp.eq.s32.totalorder %s25, 1
      %p153 = por %p151, %p152
      %p155 = scmp.ne.s32.totalorder %s140, %s154
      %p156 = scmp.eq.s32.totalorder %s25, 0
      %p157 = por %p155, %p156
      %s159 = sadd.s32 %s158, 1
      %p162 = scmp.eq.s32.totalorder %s19, 1
      %p163 = scmp.ne.s32.totalorder %s158, %s160
      %p164 = scmp.eq.s32.totalorder %s19, 0
      %p165 = por %p163, %p164
      %p166 = scmp.ne.s32.totalorder %s158, %s160
      %p167 = scmp.eq.s32.totalorder %s24, 1
      %p168 = por %p166, %p167
      %p169 = scmp.ne.s32.totalorder %s160, %s161
      %p170 = scmp.eq.s32.totalorder %s24, 0
      %p171 = por %p169, %p170
      %p172 = scmp.ne.s32.totalorder %s160, %s161
      %p173 = scmp.eq.s32.totalorder %s25, 1
      %p174 = por %p172, %p173
      %p176 = scmp.ne.s32.totalorder %s161, %s175
      %p177 = scmp.eq.s32.totalorder %s25, 0
      %p178 = por %p176, %p177
      %s180 = sadd.s32 %s179, 1
      %p183 = scmp.eq.s32.totalorder %s19, 1
      %p184 = scmp.ne.s32.totalorder %s179, %s181
      %p185 = scmp.eq.s32.totalorder %s19, 0
      %p186 = por %p184, %p185
      %p187 = scmp.ne.s32.totalorder %s179, %s181
      %p188 = scmp.eq.s32.totalorder %s24, 1
      %p189 = por %p187, %p188
      %p190 = scmp.ne.s32.totalorder %s181, %s182
      %p191 = scmp.eq.s32.totalorder %s24, 0
      %p192 = por %p190, %p191
      %p193 = scmp.ne.s32.totalorder %s181, %s182
      %p194 = scmp.eq.s32.totalorder %s25, 1
      %p195 = por %p193, %p194
      %p197 = scmp.ne.s32.totalorder %s182, %s196
      %p198 = scmp.eq.s32.totalorder %s25, 0
      %p199 = por %p197, %p198
      %s200 = ssub.s32 %s19, %s26
      %p201 = scmp.eq.s32.totalorder %s200, 0
      %s203 = sadd.s32 %s202, 1
      %s204 = scalar_select %p201, %s202, %s203
      %p207 = pneg %p201
      %p208 = scmp.eq.s32.totalorder %s19, 1
      %p209 = por %p207, %p208
      %p210 = scmp.ne.s32.totalorder %s202, %s205
      %p211 = scmp.eq.s32.totalorder %s19, 0
      %p212 = por %p210, %p211
      %p213 = scmp.ne.s32.totalorder %s202, %s205
      %p214 = scmp.eq.s32.totalorder %s24, 1
      %p215 = por %p213, %p214
      %p216 = scmp.ne.s32.totalorder %s205, %s206
      %p217 = scmp.eq.s32.totalorder %s24, 0
      %p218 = por %p216, %p217
      %p219 = scmp.ne.s32.totalorder %s205, %s206
      %p220 = scmp.eq.s32.totalorder %s25, 1
      %p221 = por %p219, %p220
      %p223 = scmp.ne.s32.totalorder %s206, %s222
      %p224 = scmp.eq.s32.totalorder %s25, 0
      %p225 = por %p223, %p224
      %s226 = ssub.s32 %s19, %s26
      %p227 = scmp.eq.s32.totalorder %s226, 0
      %s229 = sadd.s32 %s228, 1
      %s230 = scalar_select %p227, %s228, %s229
      %p233 = pneg %p227
      %p234 = scmp.eq.s32.totalorder %s19, 1
      %p235 = por %p233, %p234
      %p236 = scmp.ne.s32.totalorder %s228, %s231
      %p237 = scmp.eq.s32.totalorder %s19, 0
      %p238 = por %p236, %p237
      %p239 = scmp.ne.s32.totalorder %s228, %s231
      %p240 = scmp.eq.s32.totalorder %s24, 1
      %p241 = por %p239, %p240
      %p242 = scmp.ne.s32.totalorder %s231, %s232
      %p243 = scmp.eq.s32.totalorder %s24, 0
      %p244 = por %p242, %p243
      %p245 = scmp.ne.s32.totalorder %s231, %s232
      %p246 = scmp.eq.s32.totalorder %s25, 1
      %p247 = por %p245, %p246
      %p249 = scmp.ne.s32.totalorder %s232, %s248
      %p250 = scmp.eq.s32.totalorder %s25, 0
      %p251 = por %p249, %p250
      %p252 = scmp.le.s32.totalorder 1, %s19
      %p253 = scmp.lt.s32.totalorder %s19, 3
      %p254 = pnand %p252, %p253
      %p255 = pneg %p254
      // Predicated region
      $region9: #{encoder_block_forward.1} parent=5 // pred_check
        _
      $region10: #{encoder_block_forward.1} parent=5 // pred_check_branch
        %257 = sbr.rel (%p254) target = $region12
      $region11: #{encoder_block_forward.1} parent=5 // pred_region
        %s258 = ssub.s32 %s19, 1
        // Predicated region
        $region13: #{encoder_block_forward.1} parent=11 // pred_check
          %p259 = pneg %p66
        $region14: #{encoder_block_forward.1} parent=11 // pred_check_branch
          %261 = sbr.rel (%p259) target = $region16
        $region15: #{encoder_block_forward.1} parent=11 // pred_region
          _
        $region16: #{encoder_block_forward.1} parent=11 // pred_fallthru
          _
        // Predicated region
        $region17: #{encoder_block_forward.1} parent=11 // pred_check
          %p262 = pneg %p87
        $region18: #{encoder_block_forward.1} parent=11 // pred_check_branch
          %264 = sbr.rel (%p262) target = $region20
        $region19: #{encoder_block_forward.1} parent=11 // pred_region
          _
        $region20: #{encoder_block_forward.1} parent=11 // pred_fallthru
          _
        // Predicated region
        $region21: #{encoder_block_forward.1} parent=11 // pred_check
          %p265 = pneg %p108
        $region22: #{encoder_block_forward.1} parent=11 // pred_check_branch
          %267 = sbr.rel (%p265) target = $region24
        $region23: #{encoder_block_forward.1} parent=11 // pred_region
          _
        $region24: #{encoder_block_forward.1} parent=11 // pred_fallthru
          _
        // Predicated region
        $region25: #{encoder_block_forward.1} parent=11 // pred_check
          %p268 = pneg %p129
        $region26: #{encoder_block_forward.1} parent=11 // pred_check_branch
          %270 = sbr.rel (%p268) target = $region28
        $region27: #{encoder_block_forward.1} parent=11 // pred_region
          _
        $region28: #{encoder_block_forward.1} parent=11 // pred_fallthru
          _
        // Predicated region
        $region29: #{encoder_block_forward.1} parent=11 // pred_check
          %p271 = pneg %p150
        $region30: #{encoder_block_forward.1} parent=11 // pred_check_branch
          %273 = sbr.rel (%p271) target = $region32
        $region31: #{encoder_block_forward.1} parent=11 // pred_region
          _
        $region32: #{encoder_block_forward.1} parent=11 // pred_fallthru
          _
        // Predicated region
        $region33: #{encoder_block_forward.1} parent=11 // pred_check
          %p274 = pneg %p171
        $region34: #{encoder_block_forward.1} parent=11 // pred_check_branch
          %276 = sbr.rel (%p274) target = $region36
        $region35: #{encoder_block_forward.1} parent=11 // pred_region
          _
        $region36: #{encoder_block_forward.1} parent=11 // pred_fallthru
          _
        // Predicated region
        $region37: #{encoder_block_forward.1} parent=11 // pred_check
          %p277 = pneg %p192
        $region38: #{encoder_block_forward.1} parent=11 // pred_check_branch
          %279 = sbr.rel (%p277) target = $region40
        $region39: #{encoder_block_forward.1} parent=11 // pred_region
          _
        $region40: #{encoder_block_forward.1} parent=11 // pred_fallthru
          _
      $region12: #{encoder_block_forward.1} parent=5 // pred_fallthru
        _
      %p280 = scmp.lt.s32.totalorder %s19, 2
      // Predicated region
      $region41: #{encoder_block_forward.1} parent=5 // pred_check
        %p281 = pneg %p280
      $region42: #{encoder_block_forward.1} parent=5 // pred_check_branch
        %283 = sbr.rel (%p281) target = $region44
      $region43: #{encoder_block_forward.1} parent=5 // pred_region
        // Predicated region
        $region45: #{encoder_block_forward.1} parent=43 // pred_check
          %p284 = pneg %p39
        $region46: #{encoder_block_forward.1} parent=43 // pred_check_branch
          %286 = sbr.rel (%p284) target = $region48
        $region47: #{encoder_block_forward.1} parent=43 // pred_region
          %p287 = scmp.lt.s32.totalorder %s19, 1
          %s288 = scalar_select %p287, %s19, 1
          %s289 = smul.addr %s288, 2
          %s290 = smul.addr %s289, 8
          %s291 = scalar_lea.vmem %s0, %s290
        $region48: #{encoder_block_forward.1} parent=43 // pred_fallthru
          _
      $region44: #{encoder_block_forward.1} parent=5 // pred_fallthru
        _
      %p292 = scmp.le.s32.totalorder 1, %s19
      %p293 = scmp.lt.s32.totalorder %s19, 3
      %p294 = pnand %p292, %p293
      %p295 = pneg %p294
      // Predicated region
      $region49: #{encoder_block_forward.1} parent=5 // pred_check
        _
      $region50: #{encoder_block_forward.1} parent=5 // pred_check_branch
        %297 = sbr.rel (%p294) target = $region52
      $region51: #{encoder_block_forward.1} parent=5 // pred_region
        %s298 = ssub.s32 %s19, 1
        %p299 = scmp.lt.s32.totalorder %s24, 1
        %s300 = scalar_select %p299, %s24, 1
        %s301 = smul.addr %s300, 2
        %s302 = smul.addr %s301, 8
        %s303 = scalar_lea.vmem %s0, %s302
        %p304 = pneg %p45
        %p305 = pneg %p42
        %p306 = pneg %p66
        %p307 = pneg %p63
        %p308 = pneg %p87
        %p309 = pneg %p84
        %p310 = pneg %p108
        %p311 = pneg %p105
        %p312 = pneg %p129
        %p313 = pneg %p126
        %p314 = pneg %p150
        %p315 = pneg %p147
        %p316 = pneg %p171
        %p317 = pneg %p168
        %p318 = pneg %p192
        %p319 = pneg %p189
        %p320 = pneg %p218
        %p321 = pneg %p215
        %p322 = scmp.lt.s32.totalorder %s24, 1
        %s323 = scalar_select %p322, %s24, 1
        %s324 = smul.addr %s323, 2
        %s325 = smul.addr %s324, 8
        %s326 = scalar_lea.vmem %s8, %s325
        %p327 = pneg %p244
        %p328 = pneg %p241
        %s329 = sand.u32 %s231, 1
        %s330 = scalar_lea.sflag [#allocation5], %s329
        %s331 = sand.u32 %s231, 1
        %s332 = smul.addr %s331, 8
        %s333 = scalar_lea.vmem [#allocation4], %s332
        %p334 = scmp.lt.s32.totalorder %s24, 1
        %s335 = scalar_select %p334, %s24, 1
        %s336 = smul.addr %s335, 2
        %s337 = smul.addr %s336, 8
        %s338 = scalar_lea.vmem %s0, %s337
        %p339 = scmp.lt.s32.totalorder %s24, 1
        %s340 = scalar_select %p339, %s24, 1
        %s341 = smul.addr %s340, 2
        %s342 = smul.addr %s341, 8
        %s343 = scalar_lea.vmem %s8, %s342
        %vm345 = vcmask 24576
        %346 = vst.msk [vmem:[#allocation2] sm:$0x1] %vm345, 0
        %vm347 = vcmask 26625
        %vm348 = vsmask.f32 2304
        %vm349 = vmand %vm347, %vm348
        %v350 = vld [vmem:[#allocation2 + $0x8] sm:$0x6]
        %v351 = vsel %vm349, 0, %v350
        %352 = vst [vmem:[#allocation2 + $0x8] sm:$0x6] %v351
        %v353 = vld [vmem:[%s338] sm:$0xff]
        %v354 = vld [vmem:[%s338 + $0x8] sm:$0xff]
        %v355 = vpack.c.bf16 %v354, %v353
        %v357 = vunpack.c.l.b16 %v355
        %v358 = vunpack.c.h.b16 %v355
        %v359 = vpack.c.b16 %v357, %v357
        %v360 = vpack.c.b16 %v358, %v358
        %vm361 = vcmask 1040384
        %vm362 = vcmask 1044484
        %vm363 = vmor %vm361, %vm362
        %v364 = vrot.slane %v359, 7
        %v365 = vrot.slane %v364, 4
        %v366 = vrot.slane %v360, 7
        %v367 = vsel %vm363, %v365, %v366
        %v368 = vrot.slane %v366, 4
        %vm372 = vcmask 27649
        %373 = vst.msk [vmem:[#allocation2] sm:$0xe] %vm372, %v364
        %vm374 = vcmask 27648
        %375 = vst.msk [vmem:[#allocation2 + $0x4] sm:$0xf] %vm374, %v367
        %376 = vst.msk [vmem:[#allocation2 + $0x8] sm:$0x1] %vm345, %v368
        %v377 = vld [vmem:[#allocation2] sm:$0xf]
        %v378 = vld [vmem:[#allocation2 + $0x4] sm:$0xf]
        %v379 = vld [vmem:[#allocation2 + $0x8] sm:$0x1]
        %v380 = vld [vmem:[#allocation2] sm:$0xe]
        %v381 = vld [vmem:[#allocation2 + $0x8] sm:$0x3]
        %v382 = vld [vmem:[#allocation2] sm:$0xc]
        %v383 = vld [vmem:[#allocation2 + $0x8] sm:$0x7]
        %v386 = vunpack.c.l.b16 %v377
        %v387 = vunpack.c.l.b16 %v378
        %v388 = vpack.c.b16 %v387, %v386
        %v390 = vunpack.c.l.b16 %v379
        %v391 = vpack.c.b16 %v390, %v390
        %vm392 = vsmask.f32 7424
        %v394 = vshrl.u32 %v388, 16
        %v396 = vshll.u32 %v388, 16
        %v398 = vrot.slane %v396, 1
        %v399 = vor.u32 %v394, %v398
        %v401 = vshll.u32 %v391, 16
        %v403 = vrot.slane %v401, 1
        %v404 = vsel %vm392, %v399, %v403
        %405 = vrot.lane.b32.xlu0 %v404, 4
        %v406 = vpop.permute.xlu0 %405
        %v408 = vunpack.c.l.b16 %v380
        %v409 = vpack.c.b16 %v387, %v408
        %vm410 = vcmask 1046528
        %v411 = vrot.slane %v409, 1
        %v412 = vrot.slane %v391, 1
        %v413 = vsel %vm410, %v411, %v412
        %414 = vrot.lane.b32.xlu0 %v413, 8
        %v415 = vpop.permute.xlu0 %414
        %v417 = vunpack.c.l.b16 %v381
        %v418 = vpack.c.b16 %v417, %v417
        %vm419 = vsmask.f32 6400
        %v421 = vshrl.u32 %v409, 16
        %v423 = vrot.slane %v421, 1
        %v424 = vshll.u32 %v409, 16
        %v426 = vrot.slane %v424, 2
        %v427 = vor.u32 %v423, %v426
        %v429 = vshrl.u32 %v418, 16
        %v431 = vrot.slane %v429, 1
        %v432 = vshll.u32 %v418, 16
        %v434 = vrot.slane %v432, 2
        %v435 = vor.u32 %v431, %v434
        %v436 = vsel %vm419, %v427, %v435
        %437 = vrot.lane.b32.xlu0 %v436, 12
        %v438 = vpop.permute.xlu0 %437
        %v440 = vunpack.c.l.b16 %v382
        %v441 = vpack.c.b16 %v387, %v440
        %vm442 = vcmask 1045504
        %v443 = vrot.slane %v441, 2
        %v444 = vrot.slane %v418, 2
        %v445 = vsel %vm442, %v443, %v444
        %446 = vrot.lane.b32.xlu0 %v445, 16
        %v447 = vpop.permute.xlu0 %446
        %v449 = vunpack.c.l.b16 %v383
        %v450 = vpack.c.b16 %v449, %v449
        %vm451 = vsmask.f32 5376
        %v453 = vshrl.u32 %v441, 16
        %v455 = vrot.slane %v453, 2
        %v456 = vshll.u32 %v441, 16
        %v458 = vrot.slane %v456, 3
        %v459 = vor.u32 %v455, %v458
        %v461 = vshrl.u32 %v450, 16
        %v463 = vrot.slane %v461, 2
        %v464 = vshll.u32 %v450, 16
        %v466 = vrot.slane %v464, 3
        %v467 = vor.u32 %v463, %v466
        %v468 = vsel %vm451, %v459, %v467
        %469 = vrot.lane.b32.xlu0 %v468, 20
        %v470 = vpop.permute.xlu0 %469
        %vm471 = vcmask 31744
        %v473 = vsel %vm471, %v388, %v406
        %vm474 = vcmask 64512
        %v476 = vsel %vm474, %v473, %v415
        %vm477 = vcmask 97280
        %v479 = vsel %vm477, %v476, %v438
        %vm480 = vcmask 130048
        %v482 = vsel %vm480, %v479, %v447
        %vm483 = vcmask 162816
        %v485 = vsel %vm483, %v482, %v470
        %v486 = vld [vmem:[%s1] sm:$0xf]
        %v487 = vld [vmem:[%s1 + $0x4] sm:$0xf]
        %v488 = vld [vmem:[%s1 + $0x8] sm:$0xf]
        %v492 = vunpack.c.l.b16 %v486
        %v493 = vunpack.c.l.b16 %v487
        %v494 = vunpack.c.l.b16 %v488
        %v495 = vpack.c.b16 %v493, %v492
        %v496 = vpack.c.b16 %v494, %v494
        %vm498 = vcmask 195584
        %v499 = vsel %vm498, %v485, 0
        %vm501 = vcmask 1043456
        %v503 = vsel %vm501, %v496, 0
        %505 = vmatprep.subr.bf16.mxu0 0
        %506 = vmatpush1.bf16.msra.mxu0 %v495
        %507 = vmatprep.subr.bf16.mxu0 0
        %508 = vmatpush1.bf16.msra.mxu0 %v503
        %509 = vmatprep.subr.bf16.mxu0 0
        %510 = vmatpush1.bf16.msra.mxu0 0
        %511 = vmatprep.subr.bf16.mxu0 0
        %512 = vmatpush1.bf16.msra.mxu0 0
        %513 = vmatprep.subr.bf16.mxu0 0
        %514 = vmatpush1.bf16.msra.mxu0 0
        %515 = vmatprep.subr.bf16.mxu0 0
        %516 = vmatpush1.bf16.msra.mxu0 0
        %517 = vmatprep.subr.bf16.mxu0 0
        %518 = vmatpush1.bf16.msra.mxu0 0
        %519 = vmatprep.subr.bf16.mxu0 0
        %520 = vmatpush1.bf16.msra.mxu0 0
        %521 = vmatprep.subr.bf16.mxu0 0
        %522 = vmatpush1.bf16.msra.mxu0 0
        %523 = vmatprep.subr.bf16.mxu0 0
        %524 = vmatpush1.bf16.msra.mxu0 0
        %525 = vmatprep.subr.bf16.mxu0 0
        %526 = vmatpush1.bf16.msra.mxu0 0
        %527 = vmatprep.subr.bf16.mxu0 0
        %528 = vmatpush1.bf16.msra.mxu0 0
        %529 = vmatprep.subr.bf16.mxu0 0
        %530 = vmatpush1.bf16.msra.mxu0 0
        %531 = vmatprep.subr.bf16.mxu0 0
        %532 = vmatpush1.bf16.msra.mxu0 0
        %533 = vmatprep.subr.bf16.mxu0 0
        %534 = vmatpush1.bf16.msra.mxu0 0
        %535 = vmatprep.subr.bf16.mxu0 0
        %536 = vmatpush1.bf16.msra.mxu0 0
        %537 = vmatprep.mubr.bf16.mxu0 0
        %538 = vmatmul.mubr.bf16.gmra.mrb[0].mxu0 %v499
        %v539 = vpop.f32.mrb[0].mxu0
        %v540 = vadd.f32 0.0, %v539
        %v541 = vpop.f32.mrb[0].mxu0
        %v542 = vpop.f32.mrb[0].mxu0
        %v543 = vadd.f32 0.0, %v542
        %v544 = vpop.f32.mrb[0].mxu0
        %545 = vdwg.mxu0
        %v546 = vld [vmem:[%s2] sm:$0x1]
        %v548 = vlaneseq
        %v549 = vshrl.u32 %v548, 7
        %v550 = vsub.s32 0, %v549
        %v551 = vrot.slane %v546, %v550
        %v553 = vmul.f32 %v540, %v551
        %v554 = vmul.f32 %v543, %v551
        %v555 = vld [vmem:[%s3] sm:$0x1]
        %v557 = vlaneseq
        %v558 = vshrl.u32 %v557, 7
        %v559 = vsub.s32 0, %v558
        %v560 = vrot.slane %v555, %v559
        %v562 = vadd.f32 %v553, %v560
        %v563 = vadd.f32 %v554, %v560
        %v564 = vmax.f32 %v562, 0.0
        %v565 = vmax.f32 %v563, 0.0
        %vm566 = vcmask 122880
        %567 = vst.msk [vmem:[#allocation3] sm:$0x1] %vm566, 0
        %vm568 = vcmask 124929
        %vm569 = vmand %vm568, %vm348
        %v570 = vld [vmem:[#allocation3 + $0x8] sm:$0x6]
        %v571 = vsel %vm569, 0, %v570
        %572 = vst [vmem:[#allocation3 + $0x8] sm:$0x6] %v571
        %v573 = vpack.c.bf16 %v565, %v564
        %v575 = vunpack.c.l.b16 %v573
        %v576 = vunpack.c.h.b16 %v573
        %v577 = vpack.c.b16 %v575, %v575
        %v578 = vpack.c.b16 %v576, %v576
        %v579 = vrot.slane %v577, 7
        %v580 = vrot.slane %v579, 4
        %v581 = vrot.slane %v578, 7
        %v582 = vsel %vm363, %v580, %v581
        %v583 = vrot.slane %v581, 4
        %vm587 = vcmask 125953
        %588 = vst.msk [vmem:[#allocation3] sm:$0xe] %vm587, %v579
        %vm589 = vcmask 125952
        %590 = vst.msk [vmem:[#allocation3 + $0x4] sm:$0xf] %vm589, %v582
        %591 = vst.msk [vmem:[#allocation3 + $0x8] sm:$0x1] %vm566, %v583
        %v592 = vld [vmem:[#allocation3] sm:$0xf]
        %v593 = vld [vmem:[#allocation3 + $0x4] sm:$0xf]
        %v594 = vld [vmem:[#allocation3 + $0x8] sm:$0x1]
        %v595 = vld [vmem:[#allocation3] sm:$0xe]
        %v596 = vld [vmem:[#allocation3 + $0x8] sm:$0x3]
        %v597 = vld [vmem:[#allocation3] sm:$0xc]
        %v598 = vld [vmem:[#allocation3 + $0x8] sm:$0x7]
        %v601 = vunpack.c.l.b16 %v592
        %v602 = vunpack.c.l.b16 %v593
        %v603 = vpack.c.b16 %v602, %v601
        %v605 = vunpack.c.l.b16 %v594
        %v606 = vpack.c.b16 %v605, %v605
        %v608 = vshrl.u32 %v603, 16
        %v610 = vshll.u32 %v603, 16
        %v612 = vrot.slane %v610, 1
        %v613 = vor.u32 %v608, %v612
        %v615 = vshll.u32 %v606, 16
        %v617 = vrot.slane %v615, 1
        %v618 = vsel %vm392, %v613, %v617
        %619 = vrot.lane.b32.xlu0 %v618, 16
        %v620 = vpop.permute.xlu0 %619
        %v622 = vunpack.c.l.b16 %v595
        %v623 = vpack.c.b16 %v602, %v622
        %v624 = vrot.slane %v623, 1
        %v625 = vrot.slane %v606, 1
        %v626 = vsel %vm410, %v624, %v625
        %627 = vrot.lane.b32.xlu0 %v626, 32
        %v628 = vpop.permute.xlu0 %627
        %v630 = vunpack.c.l.b16 %v596
        %v631 = vpack.c.b16 %v630, %v630
        %v633 = vshrl.u32 %v623, 16
        %v635 = vrot.slane %v633, 1
        %v636 = vshll.u32 %v623, 16
        %v638 = vrot.slane %v636, 2
        %v639 = vor.u32 %v635, %v638
        %v641 = vshrl.u32 %v631, 16
        %v643 = vrot.slane %v641, 1
        %v644 = vshll.u32 %v631, 16
        %v646 = vrot.slane %v644, 2
        %v647 = vor.u32 %v643, %v646
        %v648 = vsel %vm419, %v639, %v647
        %649 = vrot.lane.b32.xlu0 %v648, 48
        %v650 = vpop.permute.xlu0 %649
        %v652 = vunpack.c.l.b16 %v597
        %v653 = vpack.c.b16 %v602, %v652
        %v654 = vrot.slane %v653, 2
        %v655 = vrot.slane %v631, 2
        %v656 = vsel %vm442, %v654, %v655
        %657 = vrot.lane.b32.xlu0 %v656, 64
        %v658 = vpop.permute.xlu0 %657
        %v660 = vunpack.c.l.b16 %v598
        %v661 = vpack.c.b16 %v660, %v660
        %v663 = vshrl.u32 %v653, 16
        %v665 = vrot.slane %v663, 2
        %v666 = vshll.u32 %v653, 16
        %v668 = vrot.slane %v666, 3
        %v669 = vor.u32 %v665, %v668
        %v671 = vshrl.u32 %v661, 16
        %v673 = vrot.slane %v671, 2
        %v674 = vshll.u32 %v661, 16
        %v676 = vrot.slane %v674, 3
        %v677 = vor.u32 %v673, %v676
        %v678 = vsel %vm451, %v669, %v677
        %679 = vrot.lane.b32.xlu0 %v678, 80
        %v680 = vpop.permute.xlu0 %679
        %v682 = vsel %vm480, %v603, %v620
        %vm683 = vcmask 261120
        %v685 = vsel %vm683, %v682, %v628
        %vm686 = vcmask 392192
        %v688 = vsel %vm686, %v685, %v650
        %vm689 = vcmask 523264
        %v691 = vsel %vm689, %v688, %v658
        %vm692 = vcmask 654336
        %v694 = vsel %vm692, %v691, %v680
        %v695 = vld [vmem:[%s4] sm:$0xf]
        %v696 = vld [vmem:[%s4 + $0x4] sm:$0xf]
        %v697 = vld [vmem:[%s4 + $0x8] sm:$0xf]
        %v698 = vld [vmem:[%s4 + $0xc] sm:$0xf]
        %v699 = vld [vmem:[%s4 + $0x10] sm:$0xf]
        %v700 = vld [vmem:[%s4 + $0x14] sm:$0xf]
        %v701 = vld [vmem:[%s4 + $0x18] sm:$0xf]
        %v702 = vld [vmem:[%s4 + $0x1c] sm:$0xf]
        %v703 = vld [vmem:[%s4 + $0x20] sm:$0xf]
        %v704 = vld [vmem:[%s4 + $0x24] sm:$0xf]
        %v705 = vld [vmem:[%s4 + $0x28] sm:$0xf]
        %v706 = vld [vmem:[%s4 + $0x2c] sm:$0xf]
        %v707 = vld [vmem:[%s5] sm:$0xf]
        %v708 = vld [vmem:[%s5 + $0x4] sm:$0xf]
        %v709 = vld [vmem:[%s5 + $0x8] sm:$0xf]
        %v713 = vunpack.c.l.b16 %v707
        %v714 = vunpack.c.l.b16 %v708
        %v715 = vunpack.c.l.b16 %v709
        %v716 = vpack.c.b16 %v714, %v713
        %v717 = vpack.c.b16 %v715, %v715
        %v720 = vsel %vm501, %v717, 0
        %722 = vmatprep.subr.bf16.mxu0 0
        %723 = vmatpush1.bf16.msra.mxu0 %v716
        %724 = vmatprep.subr.bf16.mxu0 0
        %725 = vmatpush1.bf16.msra.mxu0 %v720
        %726 = vmatprep.subr.bf16.mxu0 0
        %727 = vmatpush1.bf16.msra.mxu0 0
        %728 = vmatprep.subr.bf16.mxu0 0
        %729 = vmatpush1.bf16.msra.mxu0 0
        %730 = vmatprep.subr.bf16.mxu0 0
        %731 = vmatpush1.bf16.msra.mxu0 0
        %732 = vmatprep.subr.bf16.mxu0 0
        %733 = vmatpush1.bf16.msra.mxu0 0
        %734 = vmatprep.subr.bf16.mxu0 0
        %735 = vmatpush1.bf16.msra.mxu0 0
        %736 = vmatprep.subr.bf16.mxu0 0
        %737 = vmatpush1.bf16.msra.mxu0 0
        %738 = vmatprep.subr.bf16.mxu0 0
        %739 = vmatpush1.bf16.msra.mxu0 0
        %740 = vmatprep.subr.bf16.mxu0 0
        %741 = vmatpush1.bf16.msra.mxu0 0
        %742 = vmatprep.subr.bf16.mxu0 0
        %743 = vmatpush1.bf16.msra.mxu0 0
        %744 = vmatprep.subr.bf16.mxu0 0
        %745 = vmatpush1.bf16.msra.mxu0 0
        %746 = vmatprep.subr.bf16.mxu0 0
        %747 = vmatpush1.bf16.msra.mxu0 0
        %748 = vmatprep.subr.bf16.mxu0 0
        %749 = vmatpush1.bf16.msra.mxu0 0
        %750 = vmatprep.subr.bf16.mxu0 0
        %751 = vmatpush1.bf16.msra.mxu0 0
        %752 = vmatprep.subr.bf16.mxu0 0
        %753 = vmatpush1.bf16.msra.mxu0 0
        %754 = vmatprep.mubr.bf16.mxu0 0
        %755 = vmatmul.mubr.bf16.gmra.mrb[0].mxu0 %v499
        %v756 = vpop.f32.mrb[0].mxu0
        %v757 = vadd.f32 0.0, %v756
        %v758 = vpop.f32.mrb[0].mxu0
        %v759 = vpop.f32.mrb[0].mxu0
        %v760 = vadd.f32 0.0, %v759
        %v761 = vpop.f32.mrb[0].mxu0
        %762 = vdwg.mxu0
        %v775 = vunpack.c.l.b16 %v695
        %v776 = vunpack.c.l.b16 %v696
        %v777 = vunpack.c.l.b16 %v697
        %v778 = vunpack.c.l.b16 %v698
        %v779 = vunpack.c.l.b16 %v699
        %v780 = vunpack.c.l.b16 %v700
        %v781 = vunpack.c.l.b16 %v701
        %v782 = vunpack.c.l.b16 %v702
        %v783 = vunpack.c.l.b16 %v703
        %v784 = vunpack.c.l.b16 %v704
        %v785 = vunpack.c.l.b16 %v705
        %v786 = vunpack.c.l.b16 %v706
        %v787 = vpack.c.b16 %v776, %v775
        %v788 = vpack.c.b16 %v778, %v777
        %v789 = vpack.c.b16 %v780, %v779
        %v790 = vpack.c.b16 %v782, %v781
        %v791 = vpack.c.b16 %v784, %v783
        %v792 = vpack.c.b16 %v786, %v785
        %vm799 = vcmask 785408
        %v800 = vsel %vm799, %v694, 0
        %802 = vmatprep.subr.bf16.mxu0 0
        %803 = vmatpush1.bf16.msra.mxu0 %v787
        %804 = vmatprep.subr.bf16.mxu0 0
        %805 = vmatpush1.bf16.msra.mxu0 %v788
        %806 = vmatprep.subr.bf16.mxu0 0
        %807 = vmatpush1.bf16.msra.mxu0 %v789
        %808 = vmatprep.subr.bf16.mxu0 0
        %809 = vmatpush1.bf16.msra.mxu0 %v790
        %810 = vmatprep.subr.bf16.mxu0 0
        %811 = vmatpush1.bf16.msra.mxu0 %v791
        %812 = vmatprep.subr.bf16.mxu0 0
        %813 = vmatpush1.bf16.msra.mxu0 %v792
        %814 = vmatprep.subr.bf16.mxu0 0
        %815 = vmatpush1.bf16.msra.mxu0 0
        %816 = vmatprep.subr.bf16.mxu0 0
        %817 = vmatpush1.bf16.msra.mxu0 0
        %818 = vmatprep.subr.bf16.mxu0 0
        %819 = vmatpush1.bf16.msra.mxu0 0
        %820 = vmatprep.subr.bf16.mxu0 0
        %821 = vmatpush1.bf16.msra.mxu0 0
        %822 = vmatprep.subr.bf16.mxu0 0
        %823 = vmatpush1.bf16.msra.mxu0 0
        %824 = vmatprep.subr.bf16.mxu0 0
        %825 = vmatpush1.bf16.msra.mxu0 0
        %826 = vmatprep.subr.bf16.mxu0 0
        %827 = vmatpush1.bf16.msra.mxu0 0
        %828 = vmatprep.subr.bf16.mxu0 0
        %829 = vmatpush1.bf16.msra.mxu0 0
        %830 = vmatprep.subr.bf16.mxu0 0
        %831 = vmatpush1.bf16.msra.mxu0 0
        %832 = vmatprep.subr.bf16.mxu0 0
        %833 = vmatpush1.bf16.msra.mxu0 0
        %834 = vmatprep.mubr.bf16.mxu0 0
        %835 = vmatmul.mubr.bf16.gmra.mrb[0].mxu0 %v800
        %v836 = vpop.f32.mrb[0].mxu0
        %v837 = vadd.f32 %v757, %v836
        %v838 = vpop.f32.mrb[0].mxu0
        %v839 = vpop.f32.mrb[0].mxu0
        %v840 = vadd.f32 %v760, %v839
        %v841 = vpop.f32.mrb[0].mxu0
        %842 = vdwg.mxu0
        %v843 = vld [vmem:[%s6] sm:$0x1]
        %v845 = vlaneseq
        %v846 = vshrl.u32 %v845, 7
        %v847 = vsub.s32 0, %v846
        %v848 = vrot.slane %v843, %v847
        %v850 = vmul.f32 %v837, %v848
        %v851 = vmul.f32 %v840, %v848
        %v852 = vld [vmem:[%s7] sm:$0x1]
        %v854 = vlaneseq
        %v855 = vshrl.u32 %v854, 7
        %v856 = vsub.s32 0, %v855
        %v857 = vrot.slane %v852, %v856
        %v859 = vadd.f32 %v850, %v857
        %v860 = vadd.f32 %v851, %v857
        %v861 = vmax.f32 %v859, 0.0
        %v862 = vmax.f32 %v860, 0.0
        %863 = vst.msk [vmem:[%s343] sm:$0xff] %vm480, %v861
        %864 = vst.msk [vmem:[%s343 + $0x8] sm:$0xff] %vm480, %v862
        %v865 = vld [vmem:[%s343] ss:$2 sm:$0xff]
        %s866 = scalar_lea.vmem %s343, 1
        %v867 = vld [vmem:[%s866] ss:$2 sm:$0xff]
        %v868 = vmax.f32 %v865, %v867
        %869 = vst.msk [vmem:[%s333] sm:$0xff] %vm480, %v868
        %p870 = scmp.lt.s32.totalorder %s24, 1
        %s871 = scalar_select %p870, %s24, 1
        %s872 = smul.addr %s871, 2
        %s873 = smul.addr %s872, 8
        %s874 = scalar_lea.vmem %s8, %s873
        %s875 = sand.u32 %s231, 1
        %s876 = scalar_lea.sflag [#allocation5], %s875
        %s877 = sand.u32 %s231, 1
        %s878 = smul.addr %s877, 8
        %s879 = scalar_lea.vmem [#allocation4], %s878
        // Predicated region
        $region53: #{encoder_block_forward.1} parent=51 // pred_check
          %p880 = pneg %p215
        $region54: #{encoder_block_forward.1} parent=51 // pred_check_branch
          %882 = sbr.rel (%p880) target = $region56
        $region55: #{encoder_block_forward.1} parent=51 // pred_region
          _
        $region56: #{encoder_block_forward.1} parent=51 // pred_fallthru
          _
        // Predicated region
        $region57: #{encoder_block_forward.1} parent=51 // pred_check
          %p883 = pneg %p241
        $region58: #{encoder_block_forward.1} parent=51 // pred_check_branch
          %885 = sbr.rel (%p883) target = $region60
        $region59: #{encoder_block_forward.1} parent=51 // pred_region
          %s887 = ssub.s32 128, 128
          %888 = vsyncadd %s876, %s887
          %s889 = smul.addr %s24, 128
          %s890 = scalar_lea.hbm %s9, %s889
          %s892 = sshll.u32 %s879, 4
          %s893 = int_to_ptr.vmem [resolvable:$true] %s892
          %895 = dma.vmem_to_hbm [thread:$0]  %s893, 128, %s890, %s876
        $region60: #{encoder_block_forward.1} parent=51 // pred_fallthru
          _
      $region52: #{encoder_block_forward.1} parent=5 // pred_fallthru
        _
      %p896 = scmp.le.s32.totalorder 2, %s19
      // Predicated region
      $region61: #{encoder_block_forward.1} parent=5 // pred_check
        %p897 = pneg %p896
      $region62: #{encoder_block_forward.1} parent=5 // pred_check_branch
        %899 = sbr.rel (%p897) target = $region64
      $region63: #{encoder_block_forward.1} parent=5 // pred_region
        %s900 = ssub.s32 %s19, 2
        // Predicated region
        $region65: #{encoder_block_forward.1} parent=63 // pred_check
          %p901 = pneg %p221
        $region66: #{encoder_block_forward.1} parent=63 // pred_check_branch
          %903 = sbr.rel (%p901) target = $region68
        $region67: #{encoder_block_forward.1} parent=63 // pred_region
          %p904 = scmp.lt.s32.totalorder %s25, 1
          %s905 = scalar_select %p904, %s25, 1
          %s906 = smul.addr %s905, 2
          %s907 = smul.addr %s906, 8
          %s908 = scalar_lea.vmem %s8, %s907
        $region68: #{encoder_block_forward.1} parent=63 // pred_fallthru
          _
        // Predicated region
        $region69: #{encoder_block_forward.1} parent=63 // pred_check
          %p909 = pneg %p247
        $region70: #{encoder_block_forward.1} parent=63 // pred_check_branch
          %911 = sbr.rel (%p909) target = $region72
        $region71: #{encoder_block_forward.1} parent=63 // pred_region
          %s912 = sand.u32 %s232, 1
          %s913 = scalar_lea.sflag [#allocation5], %s912
          %s914 = sand.u32 %s232, 1
          %s915 = smul.addr %s914, 8
          %s916 = scalar_lea.vmem [#allocation4], %s915
          %917 = dma.done %s913, 128
        $region72: #{encoder_block_forward.1} parent=63 // pred_fallthru
          _
      $region64: #{encoder_block_forward.1} parent=5 // pred_fallthru
        _
    $region6: #{encoder_block_forward.1} parent=1 // loop_footer
      %s23 = sadd.s32 1, %s19
    $region7: #{encoder_block_forward.1} parent=1 // loop_footer_branch
      %18 = sbr.rel target = $region3
    $region8: #{encoder_block_forward.1} parent=1 // loop_exit
      _
    %918 = vsyncpa [#allocation5], 1
    %s919 = scalar_lea.sflag [#allocation5], 1
    %920 = vsyncpa %s919, 1

</llo_original>
